<compile_context>
chip_gen: v6e
topology: v6e:2x2x1
jax: 0.10.0
libtpu: 0.0.40
codegen_flags: <defaults>
</compile_context>

<pallas_src>
import jax
import jax.numpy as jnp
from jax.experimental import pallas as pl
from jax.experimental.pallas import tpu as pltpu


def decoder_forward(x_nchw, params):
    """CIFAR10CNNDecoderReLU22 forward: (N, 32, H, W) -> (N, 1, 2H, 2W)."""
    x = x_nchw.astype(jnp.float32)
    N, Cin, H, W = x.shape
    Cout = params["w1"].shape[1]                    # 32
    Ho, Wo = 2 * H, 2 * W
    L = Ho * Wo                                     # flattened spatial (lanes)
    K1 = 9 * Cin                                    # layer-1 contraction depth
    K2 = 9 * Cout                                   # layer-2 contraction depth

    # deconv11 rewritten as zero-upsample (stride 2) + pad (lo=1, hi=2) +
    # valid 3x3 conv with flipped / in-out-swapped weights.  Transposed
    # (channel-major) im2col: rows ordered (ky, kx, cin), cols = oy*Wo + ox.
    u = jnp.zeros((N, Cin, Ho + 2, Wo + 2), jnp.float32)
    u = u.at[:, :, 1:Ho:2, 1:Wo:2].set(x)
    p1t = jnp.concatenate(
        [u[:, :, ky:ky + Ho, kx:kx + Wo].reshape(N, Cin, L)
         for ky in range(3) for kx in range(3)],
        axis=1).astype(jnp.bfloat16)                               # (N, 288, L)

    # PyTorch ConvTranspose2d weights (Cin, Cout, kH, kW) -> matmul form
    # (taps flipped, columns ordered (ky, kx, cin)).
    w1t = jnp.transpose(jnp.flip(params["w1"], (2, 3)), (1, 2, 3, 0)
                        ).reshape(Cout, K1).astype(jnp.bfloat16)   # (32, 288)
    w2r = jnp.transpose(jnp.flip(params["w2"], (2, 3)), (1, 2, 3, 0)
                        ).reshape(1, K2).astype(jnp.bfloat16)      # (1, 288)
    b1 = params["b1"].reshape(Cout, 1).astype(jnp.float32)
    b2 = params["b2"].reshape(1, 1).astype(jnp.float32)

    # Border-validity masks for the 9 layer-2 taps (per flattened column).
    cols = jnp.arange(L, dtype=jnp.int32)
    oy, ox = cols // Wo, cols % Wo
    mask = jnp.stack(
        [((oy + ky - 1 >= 0) & (oy + ky - 1 < Ho) &
          (ox + kx - 1 >= 0) & (ox + kx - 1 < Wo))
         for ky in range(3) for kx in range(3)]).astype(jnp.float32)  # (9, L)

    def kernel(p1_ref, w1_ref, b1_ref, w2_ref, b2_ref, mask_ref, o_ref):
        # ---- deconv11: one (32, 288) x (288, 256) bf16 MXU matmul ----
        h = jnp.dot(w1_ref[...], p1_ref[0],
                    preferred_element_type=jnp.float32)        # (32, L) f32
        h = jnp.maximum(h + b1_ref[...], 0.0)                  # bias + ReLU

        # ---- deconv21: transposed im2col of h via static lane shifts ----
        taps = []
        for ky in range(3):
            for kx in range(3):
                tap = 3 * ky + kx
                s = (ky - 1) * Wo + (kx - 1)    # flattened spatial shift
                if s == 0:
                    t = h
                else:
                    t = jnp.roll(h, -s, axis=1) * mask_ref[tap:tap + 1, :]
                taps.append(t.astype(jnp.bfloat16))
        p2 = jnp.concatenate(taps, axis=0)                      # (288, L) bf16
        out = jnp.dot(w2_ref[...], p2,
                      preferred_element_type=jnp.float32)       # (1, L) f32
        o_ref[0, :, :] = out + b2_ref[...]                      # lane-dense

    flops = N * 2 * L * (K1 * Cout + K2 * 1)
    bytes_accessed = int(2 * (p1t.size + w1t.size + w2r.size)
                         + 4 * (b1.size + b2.size + mask.size + N * L))

    out = pl.pallas_call(
        kernel,
        out_shape=jax.ShapeDtypeStruct((N, 1, L), jnp.float32),
        grid=(N,),
        in_specs=[
            pl.BlockSpec((1, K1, L), lambda n: (n, 0, 0)),
            pl.BlockSpec((Cout, K1), lambda n: (0, 0)),
            pl.BlockSpec((Cout, 1), lambda n: (0, 0)),
            pl.BlockSpec((1, K2), lambda n: (0, 0)),
            pl.BlockSpec((1, 1), lambda n: (0, 0)),
            pl.BlockSpec((9, L), lambda n: (0, 0)),
        ],
        out_specs=pl.BlockSpec((1, 1, L), lambda n: (n, 0, 0)),
        compiler_params=pltpu.CompilerParams(
            dimension_semantics=("parallel",)),
        cost_estimate=pl.CostEstimate(flops=flops, transcendentals=0,
                                      bytes_accessed=bytes_accessed),
    )(p1t, w1t, b1, w2r, b2, mask)

    return out.reshape(N, 1, Ho, Wo)


def _deconv_ref_nchw(x, w, b, *, stride, padding, output_padding):
    """Plain-lax reference for ConvTranspose2d (NCHW), for correctness check."""
    k = w.shape[2]
    lo = k - 1 - padding
    w_conv = jnp.transpose(jnp.flip(w, axis=(2, 3)), (1, 0, 2, 3))  # OIHW
    out = jax.lax.conv_general_dilated(
        x, w_conv, window_strides=(1, 1),
        padding=((lo, lo + output_padding), (lo, lo + output_padding)),
        lhs_dilation=(stride, stride),
        dimension_numbers=("NCHW", "OIHW", "NCHW"))
    return out + b.reshape(1, -1, 1, 1)


if __name__ == "__main__":
    key = jax.random.PRNGKey(0)
    kin, k1, k2, k3, k4 = jax.random.split(key, 5)

    # Module forces Cin = 32; keep batch / spatial small.
    N, Cin, H, W = 2, 32, 8, 8
    x = jax.random.normal(kin, (N, Cin, H, W), jnp.float32)

    # Deterministic PyTorch-style uniform(+-1/sqrt(fan)) init.
    bound = 1.0 / ((32 * 3 * 3) ** 0.5)
    params = {
        "w1": jax.random.uniform(k1, (32, 32, 3, 3), jnp.float32, -bound, bound),
        "b1": jax.random.uniform(k2, (32,), jnp.float32, -bound, bound),
        "w2": jax.random.uniform(k3, (32, 1, 3, 3), jnp.float32, -bound, bound),
        "b2": jax.random.uniform(k4, (1,), jnp.float32, -bound, bound),
    }

    out = jax.jit(decoder_forward)(x, params)
    out = jax.block_until_ready(out)

    # Correctness check vs. plain-JAX transposed-conv reference.
    ref = _deconv_ref_nchw(x, params["w1"], params["b1"],
                           stride=2, padding=1, output_padding=1)
    ref = jnp.maximum(ref, 0.0)
    ref = _deconv_ref_nchw(ref, params["w2"], params["b2"],
                           stride=1, padding=1, output_padding=0)

    assert out.shape == (N, 1, 2 * H, 2 * W), out.shape
    # bf16 MXU operands with f32 accumulation -> ~1e-2 level agreement.
    assert jnp.allclose(out, ref, atol=2e-2, rtol=2e-2), \
        float(jnp.max(jnp.abs(out - ref)))
    print("KERNEL_OK")
</pallas_src>

<mosaic_0001>
module attributes {stable_mosaic.version = 11 : i64} {
  func.func @kernel(%arg0: i32, %arg1: memref<1x288x256xbf16, #tpu.memory_space<vmem>>, %arg2: memref<32x288xbf16, #tpu.memory_space<vmem>>, %arg3: memref<32x1xf32, #tpu.memory_space<vmem>>, %arg4: memref<1x288xbf16, #tpu.memory_space<vmem>>, %arg5: memref<1x1xf32, #tpu.memory_space<vmem>>, %arg6: memref<9x256xf32, #tpu.memory_space<vmem>>, %arg7: memref<1x1x256xf32, #tpu.memory_space<vmem>>) attributes {dimension_semantics = [#tpu.dimension_semantics<parallel>], iteration_bounds = array<i64: 2>, scalar_prefetch = 0 : i64, scratch_operands = 0 : i64, tpu.core_type = #tpu.core_type<tc>, window_params = [{transform_indices = @transform_0, window_bounds = array<i64: 1, 288, 256>}, {pipeline_mode = #tpu.pipeline_mode<synchronous>, transform_indices = @transform_1, window_bounds = array<i64: 32, 288>}, {pipeline_mode = #tpu.pipeline_mode<synchronous>, transform_indices = @transform_2, window_bounds = array<i64: 32, 1>}, {pipeline_mode = #tpu.pipeline_mode<synchronous>, transform_indices = @transform_3, window_bounds = array<i64: 1, 288>}, {pipeline_mode = #tpu.pipeline_mode<synchronous>, transform_indices = @transform_4, window_bounds = array<i64: 1, 1>}, {pipeline_mode = #tpu.pipeline_mode<synchronous>, transform_indices = @transform_5, window_bounds = array<i64: 9, 256>}, {transform_indices = @transform_6, window_bounds = array<i64: 1, 1, 256>}]} {
    %c0 = arith.constant 0 : index
    %c0_0 = arith.constant 0 : index
    %0 = vector.load %arg2[%c0, %c0_0] : memref<32x288xbf16, #tpu.memory_space<vmem>>, vector<32x288xbf16>
    %c0_1 = arith.constant 0 : index
    %c0_2 = arith.constant 0 : index
    %c0_3 = arith.constant 0 : index
    %1 = vector.load %arg1[%c0_1, %c0_2, %c0_3] : memref<1x288x256xbf16, #tpu.memory_space<vmem>>, vector<1x288x256xbf16>
    %2 = vector.shape_cast %1 : vector<1x288x256xbf16> to vector<288x256xbf16>
    %cst = arith.constant dense<0.000000e+00> : vector<32x256xf32>
    %3 = tpu.matmul %0, %2, %cst {dimension_numbers = #tpu.dot_dimension_numbers<[1], [0], [0], [1], [0, 0, 1, 1], [], []>} : vector<32x288xbf16>, vector<288x256xbf16>, vector<32x256xf32> -> vector<32x256xf32>
    %c0_4 = arith.constant 0 : index
    %c0_5 = arith.constant 0 : index
    %4 = vector.load %arg3[%c0_4, %c0_5] : memref<32x1xf32, #tpu.memory_space<vmem>>, vector<32x1xf32>
    %5 = vector.broadcast %4 : vector<32x1xf32> to vector<32x256xf32>
    %6 = arith.addf %3, %5 : vector<32x256xf32>
    %cst_6 = arith.constant 0.000000e+00 : f32
    %7 = vector.broadcast %cst_6 : f32 to vector<32x256xf32>
    %8 = arith.maximumf %6, %7 : vector<32x256xf32>
    %9 = vector.extract_strided_slice %8 {offsets = [0, 239], sizes = [32, 17], strides = [1, 1]} : vector<32x256xf32> to vector<32x17xf32>
    %10 = vector.extract_strided_slice %8 {offsets = [0, 0], sizes = [32, 239], strides = [1, 1]} : vector<32x256xf32> to vector<32x239xf32>
    %11 = tpu.concatenate %9, %10 in 1 : vector<32x17xf32>, vector<32x239xf32> -> vector<32x256xf32>
    %c0_7 = arith.constant 0 : index
    %c0_8 = arith.constant 0 : index
    %12 = vector.load %arg6[%c0_7, %c0_8] : memref<9x256xf32, #tpu.memory_space<vmem>>, vector<1x256xf32>
    %13 = vector.broadcast %12 : vector<1x256xf32> to vector<32x256xf32>
    %14 = arith.mulf %11, %13 : vector<32x256xf32>
    %15 = arith.truncf %14 : vector<32x256xf32> to vector<32x256xbf16>
    %16 = vector.extract_strided_slice %8 {offsets = [0, 240], sizes = [32, 16], strides = [1, 1]} : vector<32x256xf32> to vector<32x16xf32>
    %17 = vector.extract_strided_slice %8 {offsets = [0, 0], sizes = [32, 240], strides = [1, 1]} : vector<32x256xf32> to vector<32x240xf32>
    %18 = tpu.concatenate %16, %17 in 1 : vector<32x16xf32>, vector<32x240xf32> -> vector<32x256xf32>
    %c1 = arith.constant 1 : index
    %c0_9 = arith.constant 0 : index
    %19 = vector.load %arg6[%c1, %c0_9] : memref<9x256xf32, #tpu.memory_space<vmem>>, vector<1x256xf32>
    %20 = vector.broadcast %19 : vector<1x256xf32> to vector<32x256xf32>
    %21 = arith.mulf %18, %20 : vector<32x256xf32>
    %22 = arith.truncf %21 : vector<32x256xf32> to vector<32x256xbf16>
    %23 = vector.extract_strided_slice %8 {offsets = [0, 241], sizes = [32, 15], strides = [1, 1]} : vector<32x256xf32> to vector<32x15xf32>
    %24 = vector.extract_strided_slice %8 {offsets = [0, 0], sizes = [32, 241], strides = [1, 1]} : vector<32x256xf32> to vector<32x241xf32>
    %25 = tpu.concatenate %23, %24 in 1 : vector<32x15xf32>, vector<32x241xf32> -> vector<32x256xf32>
    %c2 = arith.constant 2 : index
    %c0_10 = arith.constant 0 : index
    %26 = vector.load %arg6[%c2, %c0_10] : memref<9x256xf32, #tpu.memory_space<vmem>>, vector<1x256xf32>
    %27 = vector.broadcast %26 : vector<1x256xf32> to vector<32x256xf32>
    %28 = arith.mulf %25, %27 : vector<32x256xf32>
    %29 = arith.truncf %28 : vector<32x256xf32> to vector<32x256xbf16>
    %30 = vector.extract_strided_slice %8 {offsets = [0, 255], sizes = [32, 1], strides = [1, 1]} : vector<32x256xf32> to vector<32x1xf32>
    %31 = vector.extract_strided_slice %8 {offsets = [0, 0], sizes = [32, 255], strides = [1, 1]} : vector<32x256xf32> to vector<32x255xf32>
    %32 = tpu.concatenate %30, %31 in 1 : vector<32x1xf32>, vector<32x255xf32> -> vector<32x256xf32>
    %c3 = arith.constant 3 : index
    %c0_11 = arith.constant 0 : index
    %33 = vector.load %arg6[%c3, %c0_11] : memref<9x256xf32, #tpu.memory_space<vmem>>, vector<1x256xf32>
    %34 = vector.broadcast %33 : vector<1x256xf32> to vector<32x256xf32>
    %35 = arith.mulf %32, %34 : vector<32x256xf32>
    %36 = arith.truncf %35 : vector<32x256xf32> to vector<32x256xbf16>
    %37 = arith.truncf %8 : vector<32x256xf32> to vector<32x256xbf16>
    %38 = vector.extract_strided_slice %8 {offsets = [0, 1], sizes = [32, 255], strides = [1, 1]} : vector<32x256xf32> to vector<32x255xf32>
    %39 = vector.extract_strided_slice %8 {offsets = [0, 0], sizes = [32, 1], strides = [1, 1]} : vector<32x256xf32> to vector<32x1xf32>
    %40 = tpu.concatenate %38, %39 in 1 : vector<32x255xf32>, vector<32x1xf32> -> vector<32x256xf32>
    %c5 = arith.constant 5 : index
    %c0_12 = arith.constant 0 : index
    %41 = vector.load %arg6[%c5, %c0_12] : memref<9x256xf32, #tpu.memory_space<vmem>>, vector<1x256xf32>
    %42 = vector.broadcast %41 : vector<1x256xf32> to vector<32x256xf32>
    %43 = arith.mulf %40, %42 : vector<32x256xf32>
    %44 = arith.truncf %43 : vector<32x256xf32> to vector<32x256xbf16>
    %45 = vector.extract_strided_slice %8 {offsets = [0, 15], sizes = [32, 241], strides = [1, 1]} : vector<32x256xf32> to vector<32x241xf32>
    %46 = vector.extract_strided_slice %8 {offsets = [0, 0], sizes = [32, 15], strides = [1, 1]} : vector<32x256xf32> to vector<32x15xf32>
    %47 = tpu.concatenate %45, %46 in 1 : vector<32x241xf32>, vector<32x15xf32> -> vector<32x256xf32>
    %c6 = arith.constant 6 : index
    %c0_13 = arith.constant 0 : index
    %48 = vector.load %arg6[%c6, %c0_13] : memref<9x256xf32, #tpu.memory_space<vmem>>, vector<1x256xf32>
    %49 = vector.broadcast %48 : vector<1x256xf32> to vector<32x256xf32>
    %50 = arith.mulf %47, %49 : vector<32x256xf32>
    %51 = arith.truncf %50 : vector<32x256xf32> to vector<32x256xbf16>
    %52 = vector.extract_strided_slice %8 {offsets = [0, 16], sizes = [32, 240], strides = [1, 1]} : vector<32x256xf32> to vector<32x240xf32>
    %53 = vector.extract_strided_slice %8 {offsets = [0, 0], sizes = [32, 16], strides = [1, 1]} : vector<32x256xf32> to vector<32x16xf32>
    %54 = tpu.concatenate %52, %53 in 1 : vector<32x240xf32>, vector<32x16xf32> -> vector<32x256xf32>
    %c7 = arith.constant 7 : index
    %c0_14 = arith.constant 0 : index
    %55 = vector.load %arg6[%c7, %c0_14] : memref<9x256xf32, #tpu.memory_space<vmem>>, vector<1x256xf32>
    %56 = vector.broadcast %55 : vector<1x256xf32> to vector<32x256xf32>
    %57 = arith.mulf %54, %56 : vector<32x256xf32>
    %58 = arith.truncf %57 : vector<32x256xf32> to vector<32x256xbf16>
    %59 = vector.extract_strided_slice %8 {offsets = [0, 17], sizes = [32, 239], strides = [1, 1]} : vector<32x256xf32> to vector<32x239xf32>
    %60 = vector.extract_strided_slice %8 {offsets = [0, 0], sizes = [32, 17], strides = [1, 1]} : vector<32x256xf32> to vector<32x17xf32>
    %61 = tpu.concatenate %59, %60 in 1 : vector<32x239xf32>, vector<32x17xf32> -> vector<32x256xf32>
    %c8 = arith.constant 8 : index
    %c0_15 = arith.constant 0 : index
    %62 = vector.load %arg6[%c8, %c0_15] : memref<9x256xf32, #tpu.memory_space<vmem>>, vector<1x256xf32>
    %63 = vector.broadcast %62 : vector<1x256xf32> to vector<32x256xf32>
    %64 = arith.mulf %61, %63 : vector<32x256xf32>
    %65 = arith.truncf %64 : vector<32x256xf32> to vector<32x256xbf16>
    %66 = tpu.concatenate %15, %22, %29, %36, %37, %44, %51, %58, %65 in 0 : vector<32x256xbf16>, vector<32x256xbf16>, vector<32x256xbf16>, vector<32x256xbf16>, vector<32x256xbf16>, vector<32x256xbf16>, vector<32x256xbf16>, vector<32x256xbf16>, vector<32x256xbf16> -> vector<288x256xbf16>
    %c0_16 = arith.constant 0 : index
    %c0_17 = arith.constant 0 : index
    %67 = vector.load %arg4[%c0_16, %c0_17] : memref<1x288xbf16, #tpu.memory_space<vmem>>, vector<1x288xbf16>
    %cst_18 = arith.constant dense<0.000000e+00> : vector<1x256xf32>
    %68 = tpu.matmul %67, %66, %cst_18 {dimension_numbers = #tpu.dot_dimension_numbers<[1], [0], [0], [1], [0, 0, 1, 1], [], []>} : vector<1x288xbf16>, vector<288x256xbf16>, vector<1x256xf32> -> vector<1x256xf32>
    %c0_19 = arith.constant 0 : index
    %c0_20 = arith.constant 0 : index
    %69 = vector.load %arg5[%c0_19, %c0_20] : memref<1x1xf32, #tpu.memory_space<vmem>>, vector<1x1xf32>
    %70 = vector.broadcast %69 : vector<1x1xf32> to vector<1x256xf32>
    %71 = arith.addf %68, %70 : vector<1x256xf32>
    %c0_21 = arith.constant 0 : index
    %c0_22 = arith.constant 0 : index
    %c0_23 = arith.constant 0 : index
    %72 = vector.load %arg7[%c0_21, %c0_22, %c0_23] : memref<1x1x256xf32, #tpu.memory_space<vmem>>, vector<1x1x256xf32>
    %73 = vector.shape_cast %72 : vector<1x1x256xf32> to vector<1x256xf32>
    %74 = vector.shape_cast %71 : vector<1x256xf32> to vector<1x1x256xf32>
    tpu.vector_store %arg7[%c0_21, %c0_22, %c0_23], %74 {strides = array<i32>} : memref<1x1x256xf32, #tpu.memory_space<vmem>>, vector<1x1x256xf32>,
    return
  }
  func.func @transform_0(%arg0: i32) -> (i32, i32, i32) {
    %c0_i32 = arith.constant 0 : i32
    %c0_i32_0 = arith.constant 0 : i32
    %c0_i32_1 = arith.constant 0 : i32
    return %arg0, %c0_i32, %c0_i32_0 : i32, i32, i32
  }
  func.func @transform_1(%arg0: i32) -> (i32, i32) {
    %c0_i32 = arith.constant 0 : i32
    %c0_i32_0 = arith.constant 0 : i32
    %c0_i32_1 = arith.constant 0 : i32
    return %c0_i32, %c0_i32_0 : i32, i32
  }
  func.func @transform_2(%arg0: i32) -> (i32, i32) {
    %c0_i32 = arith.constant 0 : i32
    %c0_i32_0 = arith.constant 0 : i32
    %c0_i32_1 = arith.constant 0 : i32
    return %c0_i32, %c0_i32_0 : i32, i32
  }
  func.func @transform_3(%arg0: i32) -> (i32, i32) {
    %c0_i32 = arith.constant 0 : i32
    %c0_i32_0 = arith.constant 0 : i32
    %c0_i32_1 = arith.constant 0 : i32
    return %c0_i32, %c0_i32_0 : i32, i32
  }
  func.func @transform_4(%arg0: i32) -> (i32, i32) {
    %c0_i32 = arith.constant 0 : i32
    %c0_i32_0 = arith.constant 0 : i32
    %c0_i32_1 = arith.constant 0 : i32
    return %c0_i32, %c0_i32_0 : i32, i32
  }
  func.func @transform_5(%arg0: i32) -> (i32, i32) {
    %c0_i32 = arith.constant 0 : i32
    %c0_i32_0 = arith.constant 0 : i32
    %c0_i32_1 = arith.constant 0 : i32
    return %c0_i32, %c0_i32_0 : i32, i32
  }
  func.func @transform_6(%arg0: i32) -> (i32, i32, i32) {
    %c0_i32 = arith.constant 0 : i32
    %c0_i32_0 = arith.constant 0 : i32
    %c0_i32_1 = arith.constant 0 : i32
    return %arg0, %c0_i32, %c0_i32_0 : i32, i32, i32
  }
}

</mosaic_0001>

<llo_original>
// kernel: decoder_forward.1
$region0: #{decoder_forward.1}
  #allocation0 [shape = 'u32[]', space=smem, size = 0x4, offset = 0x4, fixed_abs, tag = 'smem constant byte address 0x4 - core index']
  #allocation1 [shape = 'u32[144,128]{1,0:T(1,128)}', space=vmem, size = 0x12000, scoped, tag = 'internal scratch']
  #allocation2 [shape = 'f32[1,1]{1,0:T(1,128)S(1)}', space=vmem, size = 0x200, scoped, tag = 'scoped memory for decoder_forward.1']
  %s0 = inlined_call_operand.vmem [shape: bf16[2,288,256], index: 0, kind: input, shape index: {}]
  %s1 = inlined_call_operand.vmem [shape: bf16[32,288], index: 1, kind: input, shape index: {}]
  %s2 = inlined_call_operand.vmem [shape: f32[32,1], index: 2, kind: input, shape index: {}]
  %s3 = inlined_call_operand.vmem [shape: bf16[1,288], index: 3, kind: input, shape index: {}]
  %s4 = inlined_call_operand.<no memory space> [shape: f32[1,1], index: 4, kind: input, shape index: {}]
  %s5 = inlined_call_operand.vmem [shape: f32[9,256], index: 5, kind: input, shape index: {}]
  %s6 = inlined_call_operand.vmem [shape: f32[2,1,256], index: 6, kind: output, shape index: {}]
  %s7 = sld [smem:[#allocation0]]
  $region57: #{decoder_forward.1} parent=0
    _
  %s9 = ssub.s32 1, %s7
  %s10 = scalar_select 0, %s9, %s7
  %v11 = vstv %s4
  %12 = vst [vmem:[#allocation2] sm:$0x1] %v11
  loop: start=0, step=1, limit=4
  $region2: #{decoder_forward.1} parent=0 // loop_pre_header
    _
  $region3: #{decoder_forward.1} parent=0 // loop_header
    %s14 = sphi 0, %s18
    %p15 = scmp.ge.s32.totalorder %s14, 4
    %s24 = sphi 0, %s26
    %s27 = sphi 0, %s24
    %s28 = sphi 0, %s27
    %s44 = sphi 0, %s28
    %s48 = sphi 0, %s48
    %s50 = sphi 0, %s48
    %s51 = sphi 0, %s50
    %s65 = sphi 0, %s51
    %s69 = sphi 0, %s69
    %s71 = sphi 0, %s69
    %s72 = sphi 0, %s71
    %s86 = sphi 0, %s72
    %s90 = sphi 0, %s90
    %s92 = sphi 0, %s90
    %s93 = sphi 0, %s92
    %s107 = sphi 0, %s93
    %s111 = sphi 0, %s111
    %s113 = sphi 0, %s111
    %s114 = sphi 0, %s113
    %s128 = sphi 0, %s114
    %s132 = sphi 0, %s132
    %s134 = sphi 0, %s132
    %s135 = sphi 0, %s134
    %s149 = sphi 0, %s135
    %s155 = sphi 0, %s157
    %s158 = sphi 0, %s155
    %s159 = sphi 0, %s158
    %s175 = sphi 0, %s159
  $region4: #{decoder_forward.1} parent=0 // loop_header_branch
    %17 = sbr.rel (%p15) target = $region8
  $region5: #{decoder_forward.1} parent=0 // loop_body
    %s19 = ssub.s32 %s14, 1
    %s20 = ssub.s32 %s14, 2
    %s21 = sadd.s32 %s14, 1
    %s22 = ssub.s32 %s14, %s21
    %p23 = scmp.eq.s32.totalorder %s22, 0
    %s25 = sadd.s32 %s24, 1
    %s26 = scalar_select %p23, %s24, %s25
    %p29 = pneg %p23
    %p30 = scmp.eq.s32.totalorder %s14, 1
    %p31 = por %p29, %p30
    %p32 = scmp.ne.s32.totalorder %s24, %s27
    %p33 = scmp.eq.s32.totalorder %s14, 0
    %p34 = por %p32, %p33
    %p35 = scmp.ne.s32.totalorder %s24, %s27
    %p36 = scmp.eq.s32.totalorder %s19, 1
    %p37 = por %p35, %p36
    %p38 = scmp.ne.s32.totalorder %s27, %s28
    %p39 = scmp.eq.s32.totalorder %s19, 0
    %p40 = por %p38, %p39
    %p41 = scmp.ne.s32.totalorder %s27, %s28
    %p42 = scmp.eq.s32.totalorder %s20, 1
    %p43 = por %p41, %p42
    %p45 = scmp.ne.s32.totalorder %s28, %s44
    %p46 = scmp.eq.s32.totalorder %s20, 0
    %p47 = por %p45, %p46
    %s49 = sadd.s32 %s48, 1
    %p52 = scmp.eq.s32.totalorder %s14, 1
    %p53 = scmp.ne.s32.totalorder %s48, %s50
    %p54 = scmp.eq.s32.totalorder %s14, 0
    %p55 = por %p53, %p54
    %p56 = scmp.ne.s32.totalorder %s48, %s50
    %p57 = scmp.eq.s32.totalorder %s19, 1
    %p58 = por %p56, %p57
    %p59 = scmp.ne.s32.totalorder %s50, %s51
    %p60 = scmp.eq.s32.totalorder %s19, 0
    %p61 = por %p59, %p60
    %p62 = scmp.ne.s32.totalorder %s50, %s51
    %p63 = scmp.eq.s32.totalorder %s20, 1
    %p64 = por %p62, %p63
    %p66 = scmp.ne.s32.totalorder %s51, %s65
    %p67 = scmp.eq.s32.totalorder %s20, 0
    %p68 = por %p66, %p67
    %s70 = sadd.s32 %s69, 1
    %p73 = scmp.eq.s32.totalorder %s14, 1
    %p74 = scmp.ne.s32.totalorder %s69, %s71
    %p75 = scmp.eq.s32.totalorder %s14, 0
    %p76 = por %p74, %p75
    %p77 = scmp.ne.s32.totalorder %s69, %s71
    %p78 = scmp.eq.s32.totalorder %s19, 1
    %p79 = por %p77, %p78
    %p80 = scmp.ne.s32.totalorder %s71, %s72
    %p81 = scmp.eq.s32.totalorder %s19, 0
    %p82 = por %p80, %p81
    %p83 = scmp.ne.s32.totalorder %s71, %s72
    %p84 = scmp.eq.s32.totalorder %s20, 1
    %p85 = por %p83, %p84
    %p87 = scmp.ne.s32.totalorder %s72, %s86
    %p88 = scmp.eq.s32.totalorder %s20, 0
    %p89 = por %p87, %p88
    %s91 = sadd.s32 %s90, 1
    %p94 = scmp.eq.s32.totalorder %s14, 1
    %p95 = scmp.ne.s32.totalorder %s90, %s92
    %p96 = scmp.eq.s32.totalorder %s14, 0
    %p97 = por %p95, %p96
    %p98 = scmp.ne.s32.totalorder %s90, %s92
    %p99 = scmp.eq.s32.totalorder %s19, 1
    %p100 = por %p98, %p99
    %p101 = scmp.ne.s32.totalorder %s92, %s93
    %p102 = scmp.eq.s32.totalorder %s19, 0
    %p103 = por %p101, %p102
    %p104 = scmp.ne.s32.totalorder %s92, %s93
    %p105 = scmp.eq.s32.totalorder %s20, 1
    %p106 = por %p104, %p105
    %p108 = scmp.ne.s32.totalorder %s93, %s107
    %p109 = scmp.eq.s32.totalorder %s20, 0
    %p110 = por %p108, %p109
    %s112 = sadd.s32 %s111, 1
    %p115 = scmp.eq.s32.totalorder %s14, 1
    %p116 = scmp.ne.s32.totalorder %s111, %s113
    %p117 = scmp.eq.s32.totalorder %s14, 0
    %p118 = por %p116, %p117
    %p119 = scmp.ne.s32.totalorder %s111, %s113
    %p120 = scmp.eq.s32.totalorder %s19, 1
    %p121 = por %p119, %p120
    %p122 = scmp.ne.s32.totalorder %s113, %s114
    %p123 = scmp.eq.s32.totalorder %s19, 0
    %p124 = por %p122, %p123
    %p125 = scmp.ne.s32.totalorder %s113, %s114
    %p126 = scmp.eq.s32.totalorder %s20, 1
    %p127 = por %p125, %p126
    %p129 = scmp.ne.s32.totalorder %s114, %s128
    %p130 = scmp.eq.s32.totalorder %s20, 0
    %p131 = por %p129, %p130
    %s133 = sadd.s32 %s132, 1
    %p136 = scmp.eq.s32.totalorder %s14, 1
    %p137 = scmp.ne.s32.totalorder %s132, %s134
    %p138 = scmp.eq.s32.totalorder %s14, 0
    %p139 = por %p137, %p138
    %p140 = scmp.ne.s32.totalorder %s132, %s134
    %p141 = scmp.eq.s32.totalorder %s19, 1
    %p142 = por %p140, %p141
    %p143 = scmp.ne.s32.totalorder %s134, %s135
    %p144 = scmp.eq.s32.totalorder %s19, 0
    %p145 = por %p143, %p144
    %p146 = scmp.ne.s32.totalorder %s134, %s135
    %p147 = scmp.eq.s32.totalorder %s20, 1
    %p148 = por %p146, %p147
    %p150 = scmp.ne.s32.totalorder %s135, %s149
    %p151 = scmp.eq.s32.totalorder %s20, 0
    %p152 = por %p150, %p151
    %s153 = ssub.s32 %s14, %s21
    %p154 = scmp.eq.s32.totalorder %s153, 0
    %s156 = sadd.s32 %s155, 1
    %s157 = scalar_select %p154, %s155, %s156
    %p160 = pneg %p154
    %p161 = scmp.eq.s32.totalorder %s14, 1
    %p162 = por %p160, %p161
    %p163 = scmp.ne.s32.totalorder %s155, %s158
    %p164 = scmp.eq.s32.totalorder %s14, 0
    %p165 = por %p163, %p164
    %p166 = scmp.ne.s32.totalorder %s155, %s158
    %p167 = scmp.eq.s32.totalorder %s19, 1
    %p168 = por %p166, %p167
    %p169 = scmp.ne.s32.totalorder %s158, %s159
    %p170 = scmp.eq.s32.totalorder %s19, 0
    %p171 = por %p169, %p170
    %p172 = scmp.ne.s32.totalorder %s158, %s159
    %p173 = scmp.eq.s32.totalorder %s20, 1
    %p174 = por %p172, %p173
    %p176 = scmp.ne.s32.totalorder %s159, %s175
    %p177 = scmp.eq.s32.totalorder %s20, 0
    %p178 = por %p176, %p177
    %p179 = scmp.le.s32.totalorder 1, %s14
    %p180 = scmp.lt.s32.totalorder %s14, 3
    %p181 = pnand %p179, %p180
    %p182 = pneg %p181
    // Predicated region
    $region9: #{decoder_forward.1} parent=5 // pred_check
      _
    $region10: #{decoder_forward.1} parent=5 // pred_check_branch
      %184 = sbr.rel (%p181) target = $region12
    $region11: #{decoder_forward.1} parent=5 // pred_region
      %s185 = ssub.s32 %s14, 1
      // Predicated region
      $region13: #{decoder_forward.1} parent=11 // pred_check
        %p186 = pneg %p61
      $region14: #{decoder_forward.1} parent=11 // pred_check_branch
        %188 = sbr.rel (%p186) target = $region16
      $region15: #{decoder_forward.1} parent=11 // pred_region
        _
      $region16: #{decoder_forward.1} parent=11 // pred_fallthru
        _
      // Predicated region
      $region17: #{decoder_forward.1} parent=11 // pred_check
        %p189 = pneg %p82
      $region18: #{decoder_forward.1} parent=11 // pred_check_branch
        %191 = sbr.rel (%p189) target = $region20
      $region19: #{decoder_forward.1} parent=11 // pred_region
        _
      $region20: #{decoder_forward.1} parent=11 // pred_fallthru
        _
      // Predicated region
      $region21: #{decoder_forward.1} parent=11 // pred_check
        %p192 = pneg %p103
      $region22: #{decoder_forward.1} parent=11 // pred_check_branch
        %194 = sbr.rel (%p192) target = $region24
      $region23: #{decoder_forward.1} parent=11 // pred_region
        _
      $region24: #{decoder_forward.1} parent=11 // pred_fallthru
        _
      // Predicated region
      $region25: #{decoder_forward.1} parent=11 // pred_check
        %p195 = pneg %p124
      $region26: #{decoder_forward.1} parent=11 // pred_check_branch
        %197 = sbr.rel (%p195) target = $region28
      $region27: #{decoder_forward.1} parent=11 // pred_region
        _
      $region28: #{decoder_forward.1} parent=11 // pred_fallthru
        _
      // Predicated region
      $region29: #{decoder_forward.1} parent=11 // pred_check
        %p198 = pneg %p145
      $region30: #{decoder_forward.1} parent=11 // pred_check_branch
        %200 = sbr.rel (%p198) target = $region32
      $region31: #{decoder_forward.1} parent=11 // pred_region
        _
      $region32: #{decoder_forward.1} parent=11 // pred_fallthru
        _
    $region12: #{decoder_forward.1} parent=5 // pred_fallthru
      _
    %p201 = scmp.lt.s32.totalorder %s14, 2
    // Predicated region
    $region33: #{decoder_forward.1} parent=5 // pred_check
      %p202 = pneg %p201
    $region34: #{decoder_forward.1} parent=5 // pred_check_branch
      %204 = sbr.rel (%p202) target = $region36
    $region35: #{decoder_forward.1} parent=5 // pred_region
      // Predicated region
      $region37: #{decoder_forward.1} parent=35 // pred_check
        %p205 = pneg %p34
      $region38: #{decoder_forward.1} parent=35 // pred_check_branch
        %207 = sbr.rel (%p205) target = $region40
      $region39: #{decoder_forward.1} parent=35 // pred_region
        %p208 = scmp.lt.s32.totalorder %s14, 1
        %s209 = scalar_select %p208, %s14, 1
        %s210 = smul.addr %s209, 72
        %s211 = smul.addr %s210, 4
        %s212 = scalar_lea.vmem %s0, %s211
      $region40: #{decoder_forward.1} parent=35 // pred_fallthru
        _
    $region36: #{decoder_forward.1} parent=5 // pred_fallthru
      _
    %p213 = scmp.le.s32.totalorder 1, %s14
    %p214 = scmp.lt.s32.totalorder %s14, 3
    %p215 = pnand %p213, %p214
    %p216 = pneg %p215
    // Predicated region
    $region41: #{decoder_forward.1} parent=5 // pred_check
      _
    $region42: #{decoder_forward.1} parent=5 // pred_check_branch
      %218 = sbr.rel (%p215) target = $region44
    $region43: #{decoder_forward.1} parent=5 // pred_region
      %s219 = ssub.s32 %s14, 1
      %p220 = scmp.lt.s32.totalorder %s19, 1
      %s221 = scalar_select %p220, %s19, 1
      %s222 = smul.addr %s221, 72
      %s223 = smul.addr %s222, 4
      %s224 = scalar_lea.vmem %s0, %s223
      %p225 = pneg %p40
      %p226 = pneg %p37
      %p227 = pneg %p61
      %p228 = pneg %p58
      %p229 = pneg %p82
      %p230 = pneg %p79
      %p231 = pneg %p103
      %p232 = pneg %p100
      %p233 = pneg %p124
      %p234 = pneg %p121
      %p235 = pneg %p145
      %p236 = pneg %p142
      %p237 = pneg %p171
      %p238 = pneg %p168
      %p239 = scmp.lt.s32.totalorder %s19, 1
      %s240 = scalar_select %p239, %s19, 1
      %s241 = smul.addr %s240, 2
      %s242 = scalar_lea.vmem %s6, %s241
      %p243 = scmp.lt.s32.totalorder %s19, 1
      %s244 = scalar_select %p243, %s19, 1
      %s245 = smul.addr %s244, 72
      %s246 = smul.addr %s245, 4
      %s247 = scalar_lea.vmem %s0, %s246
      %p248 = scmp.lt.s32.totalorder %s19, 1
      %s249 = scalar_select %p248, %s19, 1
      %s250 = smul.addr %s249, 2
      %s251 = scalar_lea.vmem %s6, %s250
      %v253 = vld [vmem:[%s1] sm:$0xff]
      %v254 = vld [vmem:[%s1 + $0x8] sm:$0xf]
      %v255 = vld [vmem:[%s1 + $0xc] sm:$0xff]
      %v256 = vld [vmem:[%s1 + $0x14] sm:$0xf]
      %v257 = vld [vmem:[%s1 + $0x18] sm:$0xff]
      %v258 = vld [vmem:[%s1 + $0x20] sm:$0xf]
      %v259 = vld [vmem:[%s1 + $0x24] sm:$0xff]
      %v260 = vld [vmem:[%s1 + $0x2c] sm:$0xf]
      %v261 = vld [vmem:[%s247] sm:$0xff]
      %v262 = vld [vmem:[%s247 + $0x8] sm:$0xff]
      %v263 = vld [vmem:[%s247 + $0x10] sm:$0xff]
      %v264 = vld [vmem:[%s247 + $0x18] sm:$0xff]
      %v265 = vld [vmem:[%s247 + $0x20] sm:$0xff]
      %v266 = vld [vmem:[%s247 + $0x28] sm:$0xff]
      %v267 = vld [vmem:[%s247 + $0x30] sm:$0xff]
      %v268 = vld [vmem:[%s247 + $0x38] sm:$0xff]
      %v269 = vld [vmem:[%s247 + $0x40] sm:$0xff]
      %v270 = vld [vmem:[%s247 + $0x48] sm:$0xff]
      %v271 = vld [vmem:[%s247 + $0x50] sm:$0xff]
      %v272 = vld [vmem:[%s247 + $0x58] sm:$0xff]
      %v273 = vld [vmem:[%s247 + $0x60] sm:$0xff]
      %v274 = vld [vmem:[%s247 + $0x68] sm:$0xff]
      %v275 = vld [vmem:[%s247 + $0x70] sm:$0xff]
      %v276 = vld [vmem:[%s247 + $0x78] sm:$0xff]
      %v277 = vld [vmem:[%s247 + $0x80] sm:$0xff]
      %v278 = vld [vmem:[%s247 + $0x88] sm:$0xff]
      %v279 = vld [vmem:[%s247 + $0x90] sm:$0xff]
      %v280 = vld [vmem:[%s247 + $0x98] sm:$0xff]
      %v281 = vld [vmem:[%s247 + $0xa0] sm:$0xff]
      %v282 = vld [vmem:[%s247 + $0xa8] sm:$0xff]
      %v283 = vld [vmem:[%s247 + $0xb0] sm:$0xff]
      %v284 = vld [vmem:[%s247 + $0xb8] sm:$0xff]
      %v285 = vld [vmem:[%s247 + $0xc0] sm:$0xff]
      %v286 = vld [vmem:[%s247 + $0xc8] sm:$0xff]
      %v287 = vld [vmem:[%s247 + $0xd0] sm:$0xff]
      %v288 = vld [vmem:[%s247 + $0xd8] sm:$0xff]
      %v289 = vld [vmem:[%s247 + $0xe0] sm:$0xff]
      %v290 = vld [vmem:[%s247 + $0xe8] sm:$0xff]
      %v291 = vld [vmem:[%s247 + $0xf0] sm:$0xff]
      %v292 = vld [vmem:[%s247 + $0xf8] sm:$0xff]
      %v293 = vld [vmem:[%s247 + $0x100] sm:$0xff]
      %v294 = vld [vmem:[%s247 + $0x108] sm:$0xff]
      %v295 = vld [vmem:[%s247 + $0x110] sm:$0xff]
      %v296 = vld [vmem:[%s247 + $0x118] sm:$0xff]
      %v297 = vld [vmem:[%s2] sm:$0xff]
      %v298 = vld [vmem:[%s2 + $0x8] sm:$0xff]
      %v299 = vld [vmem:[%s2 + $0x10] sm:$0xff]
      %v300 = vld [vmem:[%s2 + $0x18] sm:$0xff]
      %302 = vset.pattern.permute.xlu0 0
      %303 = vperm.xlu0 %302, %v297
      %v304 = vpop.permute.xlu0 %303
      %307 = vset.pattern.permute.xlu0 0
      %308 = vperm.xlu0 %307, %v298
      %v309 = vpop.permute.xlu0 %308
      %312 = vset.pattern.permute.xlu0 0
      %313 = vperm.xlu0 %312, %v299
      %v314 = vpop.permute.xlu0 %313
      %317 = vset.pattern.permute.xlu0 0
      %318 = vperm.xlu0 %317, %v300
      %v319 = vpop.permute.xlu0 %318
      %v329 = vunpack.c.l.b16 %v253
      %v330 = vunpack.c.h.b16 %v253
      %v331 = vunpack.c.l.b16 %v254
      %v332 = vunpack.c.l.b16 %v255
      %v333 = vunpack.c.h.b16 %v255
      %v334 = vunpack.c.l.b16 %v256
      %v335 = vunpack.c.l.b16 %v257
      %v336 = vunpack.c.h.b16 %v257
      %v337 = vunpack.c.l.b16 %v258
      %v338 = vunpack.c.l.b16 %v259
      %v339 = vunpack.c.h.b16 %v259
      %v340 = vunpack.c.l.b16 %v260
      %v341 = vpack.c.b16 %v332, %v329
      %v342 = vpack.c.b16 %v333, %v330
      %v343 = vpack.c.b16 %v334, %v331
      %v344 = vpack.c.b16 %v338, %v335
      %v345 = vpack.c.b16 %v339, %v336
      %v346 = vpack.c.b16 %v340, %v337
      %v387 = vunpack.c.l.b16 %v261
      %v388 = vunpack.c.h.b16 %v261
      %v389 = vunpack.c.l.b16 %v262
      %v390 = vunpack.c.h.b16 %v262
      %v391 = vunpack.c.l.b16 %v263
      %v392 = vunpack.c.h.b16 %v263
      %v393 = vunpack.c.l.b16 %v264
      %v394 = vunpack.c.h.b16 %v264
      %v395 = vunpack.c.l.b16 %v265
      %v396 = vunpack.c.h.b16 %v265
      %v397 = vunpack.c.l.b16 %v266
      %v398 = vunpack.c.h.b16 %v266
      %v399 = vunpack.c.l.b16 %v267
      %v400 = vunpack.c.h.b16 %v267
      %v401 = vunpack.c.l.b16 %v268
      %v402 = vunpack.c.h.b16 %v268
      %v403 = vunpack.c.l.b16 %v269
      %v404 = vunpack.c.h.b16 %v269
      %v405 = vunpack.c.l.b16 %v270
      %v406 = vunpack.c.h.b16 %v270
      %v407 = vunpack.c.l.b16 %v271
      %v408 = vunpack.c.h.b16 %v271
      %v409 = vunpack.c.l.b16 %v272
      %v410 = vunpack.c.h.b16 %v272
      %v411 = vunpack.c.l.b16 %v273
      %v412 = vunpack.c.h.b16 %v273
      %v413 = vunpack.c.l.b16 %v274
      %v414 = vunpack.c.h.b16 %v274
      %v415 = vunpack.c.l.b16 %v275
      %v416 = vunpack.c.h.b16 %v275
      %v417 = vunpack.c.l.b16 %v276
      %v418 = vunpack.c.h.b16 %v276
      %v419 = vunpack.c.l.b16 %v277
      %v420 = vunpack.c.h.b16 %v277
      %v421 = vunpack.c.l.b16 %v278
      %v422 = vunpack.c.h.b16 %v278
      %v423 = vunpack.c.l.b16 %v279
      %v424 = vunpack.c.h.b16 %v279
      %v425 = vunpack.c.l.b16 %v280
      %v426 = vunpack.c.h.b16 %v280
      %v427 = vunpack.c.l.b16 %v281
      %v428 = vunpack.c.h.b16 %v281
      %v429 = vunpack.c.l.b16 %v282
      %v430 = vunpack.c.h.b16 %v282
      %v431 = vunpack.c.l.b16 %v283
      %v432 = vunpack.c.h.b16 %v283
      %v433 = vunpack.c.l.b16 %v284
      %v434 = vunpack.c.h.b16 %v284
      %v435 = vunpack.c.l.b16 %v285
      %v436 = vunpack.c.h.b16 %v285
      %v437 = vunpack.c.l.b16 %v286
      %v438 = vunpack.c.h.b16 %v286
      %v439 = vunpack.c.l.b16 %v287
      %v440 = vunpack.c.h.b16 %v287
      %v441 = vunpack.c.l.b16 %v288
      %v442 = vunpack.c.h.b16 %v288
      %v443 = vunpack.c.l.b16 %v289
      %v444 = vunpack.c.h.b16 %v289
      %v445 = vunpack.c.l.b16 %v290
      %v446 = vunpack.c.h.b16 %v290
      %v447 = vunpack.c.l.b16 %v291
      %v448 = vunpack.c.h.b16 %v291
      %v449 = vunpack.c.l.b16 %v292
      %v450 = vunpack.c.h.b16 %v292
      %v451 = vunpack.c.l.b16 %v293
      %v452 = vunpack.c.h.b16 %v293
      %v453 = vunpack.c.l.b16 %v294
      %v454 = vunpack.c.h.b16 %v294
      %v455 = vunpack.c.l.b16 %v295
      %v456 = vunpack.c.h.b16 %v295
      %v457 = vunpack.c.l.b16 %v296
      %v458 = vunpack.c.h.b16 %v296
      %v459 = vpack.c.b16 %v389, %v387
      %v460 = vpack.c.b16 %v390, %v388
      %v461 = vpack.c.b16 %v393, %v391
      %v462 = vpack.c.b16 %v394, %v392
      %v463 = vpack.c.b16 %v397, %v395
      %v464 = vpack.c.b16 %v398, %v396
      %v465 = vpack.c.b16 %v401, %v399
      %v466 = vpack.c.b16 %v402, %v400
      %v467 = vpack.c.b16 %v405, %v403
      %v468 = vpack.c.b16 %v406, %v404
      %v469 = vpack.c.b16 %v409, %v407
      %v470 = vpack.c.b16 %v410, %v408
      %v471 = vpack.c.b16 %v413, %v411
      %v472 = vpack.c.b16 %v414, %v412
      %v473 = vpack.c.b16 %v417, %v415
      %v474 = vpack.c.b16 %v418, %v416
      %v475 = vpack.c.b16 %v421, %v419
      %v476 = vpack.c.b16 %v422, %v420
      %v477 = vpack.c.b16 %v425, %v423
      %v478 = vpack.c.b16 %v426, %v424
      %v479 = vpack.c.b16 %v429, %v427
      %v480 = vpack.c.b16 %v430, %v428
      %v481 = vpack.c.b16 %v433, %v431
      %v482 = vpack.c.b16 %v434, %v432
      %v483 = vpack.c.b16 %v437, %v435
      %v484 = vpack.c.b16 %v438, %v436
      %v485 = vpack.c.b16 %v441, %v439
      %v486 = vpack.c.b16 %v442, %v440
      %v487 = vpack.c.b16 %v445, %v443
      %v488 = vpack.c.b16 %v446, %v444
      %v489 = vpack.c.b16 %v449, %v447
      %v490 = vpack.c.b16 %v450, %v448
      %v491 = vpack.c.b16 %v453, %v451
      %v492 = vpack.c.b16 %v454, %v452
      %v493 = vpack.c.b16 %v457, %v455
      %v494 = vpack.c.b16 %v458, %v456
      %vm531 = vcmask 261120
      %v533 = vsel %vm531, %v343, 0
      %v536 = vsel %vm531, %v346, 0
      %538 = vmatprep.subr.bf16.mxu0 %v474
      %539 = vmatpush1.bf16.msra.mxu0 %v473
      %540 = vmatprep.subr.bf16.mxu0 %v472
      %541 = vmatpush1.bf16.msra.mxu0 %v471
      %542 = vmatprep.subr.bf16.mxu0 %v470
      %543 = vmatpush1.bf16.msra.mxu0 %v469
      %544 = vmatprep.subr.bf16.mxu0 %v468
      %545 = vmatpush1.bf16.msra.mxu0 %v467
      %546 = vmatprep.subr.bf16.mxu0 %v466
      %547 = vmatpush1.bf16.msra.mxu0 %v465
      %548 = vmatprep.subr.bf16.mxu0 %v464
      %549 = vmatpush1.bf16.msra.mxu0 %v463
      %550 = vmatprep.subr.bf16.mxu0 %v462
      %551 = vmatpush1.bf16.msra.mxu0 %v461
      %552 = vmatprep.subr.bf16.mxu0 %v460
      %553 = vmatpush1.bf16.msra.mxu0 %v459
      %554 = vmatprep.subr.bf16.mxu0 %v490
      %555 = vmatpush2.bf16.msra.mxu0 %v489
      %556 = vmatprep.subr.bf16.mxu0 %v488
      %557 = vmatpush2.bf16.msra.mxu0 %v487
      %558 = vmatprep.subr.bf16.mxu0 %v486
      %559 = vmatpush2.bf16.msra.mxu0 %v485
      %560 = vmatprep.subr.bf16.mxu0 %v484
      %561 = vmatpush2.bf16.msra.mxu0 %v483
      %562 = vmatprep.subr.bf16.mxu0 %v482
      %563 = vmatpush2.bf16.msra.mxu0 %v481
      %564 = vmatprep.subr.bf16.mxu0 %v480
      %565 = vmatpush2.bf16.msra.mxu0 %v479
      %566 = vmatprep.subr.bf16.mxu0 %v478
      %567 = vmatpush2.bf16.msra.mxu0 %v477
      %568 = vmatprep.subr.bf16.mxu0 %v476
      %569 = vmatpush2.bf16.msra.mxu0 %v475
      %570 = vmatprep.mubr.bf16.mxu0 %v342
      %571 = vmatmul.mubr.bf16.gmra.mxu0 %v341
      %v572 = vpop.f32.mrf.mxu0
      %v573 = vadd.f32 %v304, %v572
      %v574 = vpop.f32.mrf.mxu0
      %v575 = vadd.f32 %v304, %v574
      %v576 = vpop.f32.mrf.mxu0
      %v577 = vadd.f32 %v309, %v576
      %v578 = vpop.f32.mrf.mxu0
      %v579 = vadd.f32 %v309, %v578
      %580 = vmatprep.mubr.bf16.mxu0 %v345
      %581 = vmatmul.mubr.bf16.gmra.mxu0 %v344
      %v582 = vpop.f32.mrf.mxu0
      %v583 = vadd.f32 %v314, %v582
      %v584 = vpop.f32.mrf.mxu0
      %v585 = vadd.f32 %v314, %v584
      %v586 = vpop.f32.mrf.mxu0
      %v587 = vadd.f32 %v319, %v586
      %v588 = vpop.f32.mrf.mxu0
      %v589 = vadd.f32 %v319, %v588
      %590 = vdwg.mxu0
      %591 = vmatprep.subr.bf16.mxu0 0
      %592 = vmatpush1.bf16.msra.mxu0 0
      %593 = vmatprep.subr.bf16.mxu0 0
      %594 = vmatpush1.bf16.msra.mxu0 0
      %595 = vmatprep.subr.bf16.mxu0 0
      %596 = vmatpush1.bf16.msra.mxu0 0
      %597 = vmatprep.subr.bf16.mxu0 0
      %598 = vmatpush1.bf16.msra.mxu0 0
      %599 = vmatprep.subr.bf16.mxu0 0
      %600 = vmatpush1.bf16.msra.mxu0 0
      %601 = vmatprep.subr.bf16.mxu0 0
      %602 = vmatpush1.bf16.msra.mxu0 0
      %603 = vmatprep.subr.bf16.mxu0 %v494
      %604 = vmatpush1.bf16.msra.mxu0 %v493
      %605 = vmatprep.subr.bf16.mxu0 %v492
      %606 = vmatpush1.bf16.msra.mxu0 %v491
      %607 = vmatprep.subr.bf16.mxu0 0
      %608 = vmatpush2.bf16.msra.mxu0 0
      %609 = vmatprep.subr.bf16.mxu0 0
      %610 = vmatpush2.bf16.msra.mxu0 0
      %611 = vmatprep.subr.bf16.mxu0 0
      %612 = vmatpush2.bf16.msra.mxu0 0
      %613 = vmatprep.subr.bf16.mxu0 0
      %614 = vmatpush2.bf16.msra.mxu0 0
      %615 = vmatprep.subr.bf16.mxu0 0
      %616 = vmatpush2.bf16.msra.mxu0 0
      %617 = vmatprep.subr.bf16.mxu0 0
      %618 = vmatpush2.bf16.msra.mxu0 0
      %619 = vmatprep.subr.bf16.mxu0 0
      %620 = vmatpush2.bf16.msra.mxu0 0
      %621 = vmatprep.subr.bf16.mxu0 0
      %622 = vmatpush2.bf16.msra.mxu0 0
      %623 = vmatprep.mubr.bf16.mxu0 0
      %624 = vmatmul.mubr.bf16.gmra.mxu0 %v533
      %v625 = vpop.f32.mrf.mxu0
      %v626 = vadd.f32 %v573, %v625
      %v627 = vpop.f32.mrf.mxu0
      %v628 = vadd.f32 %v575, %v627
      %v629 = vpop.f32.mrf.mxu0
      %v630 = vadd.f32 %v577, %v629
      %v631 = vpop.f32.mrf.mxu0
      %v632 = vadd.f32 %v579, %v631
      %633 = vmatprep.mubr.bf16.mxu0 0
      %634 = vmatmul.mubr.bf16.gmra.mxu0 %v536
      %v635 = vpop.f32.mrf.mxu0
      %v636 = vadd.f32 %v583, %v635
      %v637 = vpop.f32.mrf.mxu0
      %v638 = vadd.f32 %v585, %v637
      %v639 = vpop.f32.mrf.mxu0
      %v640 = vadd.f32 %v587, %v639
      %v641 = vpop.f32.mrf.mxu0
      %v642 = vadd.f32 %v589, %v641
      %643 = vdwg.mxu0
      %v644 = vmax.f32 %v626, 0.0
      %v645 = vmax.f32 %v628, 0.0
      %v646 = vmax.f32 %v630, 0.0
      %v647 = vmax.f32 %v632, 0.0
      %v648 = vmax.f32 %v636, 0.0
      %v649 = vmax.f32 %v638, 0.0
      %v650 = vmax.f32 %v640, 0.0
      %v651 = vmax.f32 %v642, 0.0
      %656 = vrot.lane.b32.xlu0 %v645, 17
      %v657 = vpop.permute.xlu0 %656
      %658 = vrot.lane.b32.xlu0 %v647, 17
      %v659 = vpop.permute.xlu0 %658
      %660 = vrot.lane.b32.xlu0 %v649, 17
      %v661 = vpop.permute.xlu0 %660
      %662 = vrot.lane.b32.xlu0 %v651, 17
      %v663 = vpop.permute.xlu0 %662
      %672 = vrot.lane.b32.xlu0 %v644, 17
      %v673 = vpop.permute.xlu0 %672
      %674 = vrot.lane.b32.xlu0 %v646, 17
      %v675 = vpop.permute.xlu0 %674
      %676 = vrot.lane.b32.xlu0 %v648, 17
      %v677 = vpop.permute.xlu0 %676
      %678 = vrot.lane.b32.xlu0 %v650, 17
      %v679 = vpop.permute.xlu0 %678
      %vm680 = vcmask 138240
      %v681 = vsel %vm680, %v673, %v657
      %v682 = vsel %vm680, %v675, %v659
      %v683 = vsel %vm680, %v677, %v661
      %v684 = vsel %vm680, %v679, %v663
      %v693 = vsel %vm680, %v657, %v673
      %v694 = vsel %vm680, %v659, %v675
      %v695 = vsel %vm680, %v661, %v677
      %v696 = vsel %vm680, %v663, %v679
      %v697 = vld [vmem:[%s5] ss:$8 sm:$0x3]
      %v699 = vlaneseq
      %v700 = vshrl.u32 %v699, 7
      %v701 = vsub.s32 0, %v700
      %v702 = vrot.slane %v697, %v701
      %v703 = vlaneseq
      %v704 = vshrl.u32 %v703, 7
      %v705 = vsub.s32 1, %v704
      %v706 = vrot.slane %v697, %v705
      %v709 = vmul.f32 %v693, %v702
      %v710 = vmul.f32 %v681, %v706
      %v711 = vmul.f32 %v694, %v702
      %v712 = vmul.f32 %v682, %v706
      %v713 = vmul.f32 %v695, %v702
      %v714 = vmul.f32 %v683, %v706
      %v715 = vmul.f32 %v696, %v702
      %v716 = vmul.f32 %v684, %v706
      %v717 = vpack.c.bf16 %v711, %v709
      %v718 = vpack.c.bf16 %v712, %v710
      %v719 = vpack.c.bf16 %v715, %v713
      %v720 = vpack.c.bf16 %v716, %v714
      %721 = vrot.lane.b32.xlu0 %v645, 16
      %v722 = vpop.permute.xlu0 %721
      %723 = vrot.lane.b32.xlu0 %v647, 16
      %v724 = vpop.permute.xlu0 %723
      %725 = vrot.lane.b32.xlu0 %v649, 16
      %v726 = vpop.permute.xlu0 %725
      %727 = vrot.lane.b32.xlu0 %v651, 16
      %v728 = vpop.permute.xlu0 %727
      %733 = vrot.lane.b32.xlu0 %v644, 16
      %v734 = vpop.permute.xlu0 %733
      %735 = vrot.lane.b32.xlu0 %v646, 16
      %v736 = vpop.permute.xlu0 %735
      %737 = vrot.lane.b32.xlu0 %v648, 16
      %v738 = vpop.permute.xlu0 %737
      %739 = vrot.lane.b32.xlu0 %v650, 16
      %v740 = vpop.permute.xlu0 %739
      %vm741 = vcmask 130048
      %v742 = vsel %vm741, %v734, %v722
      %v743 = vsel %vm741, %v736, %v724
      %v744 = vsel %vm741, %v738, %v726
      %v745 = vsel %vm741, %v740, %v728
      %v754 = vsel %vm741, %v722, %v734
      %v755 = vsel %vm741, %v724, %v736
      %v756 = vsel %vm741, %v726, %v738
      %v757 = vsel %vm741, %v728, %v740
      %s758 = scalar_lea.vmem %s5, 1
      %v759 = vld [vmem:[%s758] ss:$8 sm:$0x3]
      %v761 = vlaneseq
      %v762 = vshrl.u32 %v761, 7
      %v763 = vsub.s32 0, %v762
      %v764 = vrot.slane %v759, %v763
      %v765 = vlaneseq
      %v766 = vshrl.u32 %v765, 7
      %v767 = vsub.s32 1, %v766
      %v768 = vrot.slane %v759, %v767
      %v771 = vmul.f32 %v754, %v764
      %v772 = vmul.f32 %v742, %v768
      %v773 = vmul.f32 %v755, %v764
      %v774 = vmul.f32 %v743, %v768
      %v775 = vmul.f32 %v756, %v764
      %v776 = vmul.f32 %v744, %v768
      %v777 = vmul.f32 %v757, %v764
      %v778 = vmul.f32 %v745, %v768
      %v779 = vpack.c.bf16 %v773, %v771
      %v780 = vpack.c.bf16 %v774, %v772
      %v781 = vpack.c.bf16 %v777, %v775
      %v782 = vpack.c.bf16 %v778, %v776
      %783 = vrot.lane.b32.xlu0 %v645, 15
      %v784 = vpop.permute.xlu0 %783
      %785 = vrot.lane.b32.xlu0 %v647, 15
      %v786 = vpop.permute.xlu0 %785
      %787 = vrot.lane.b32.xlu0 %v649, 15
      %v788 = vpop.permute.xlu0 %787
      %789 = vrot.lane.b32.xlu0 %v651, 15
      %v790 = vpop.permute.xlu0 %789
      %795 = vrot.lane.b32.xlu0 %v644, 15
      %v796 = vpop.permute.xlu0 %795
      %797 = vrot.lane.b32.xlu0 %v646, 15
      %v798 = vpop.permute.xlu0 %797
      %799 = vrot.lane.b32.xlu0 %v648, 15
      %v800 = vpop.permute.xlu0 %799
      %801 = vrot.lane.b32.xlu0 %v650, 15
      %v802 = vpop.permute.xlu0 %801
      %vm803 = vcmask 121856
      %v804 = vsel %vm803, %v796, %v784
      %v805 = vsel %vm803, %v798, %v786
      %v806 = vsel %vm803, %v800, %v788
      %v807 = vsel %vm803, %v802, %v790
      %v816 = vsel %vm803, %v784, %v796
      %v817 = vsel %vm803, %v786, %v798
      %v818 = vsel %vm803, %v788, %v800
      %v819 = vsel %vm803, %v790, %v802
      %s820 = scalar_lea.vmem %s5, 2
      %v821 = vld [vmem:[%s820] ss:$8 sm:$0x3]
      %v823 = vlaneseq
      %v824 = vshrl.u32 %v823, 7
      %v825 = vsub.s32 0, %v824
      %v826 = vrot.slane %v821, %v825
      %v827 = vlaneseq
      %v828 = vshrl.u32 %v827, 7
      %v829 = vsub.s32 1, %v828
      %v830 = vrot.slane %v821, %v829
      %v833 = vmul.f32 %v816, %v826
      %v834 = vmul.f32 %v804, %v830
      %v835 = vmul.f32 %v817, %v826
      %v836 = vmul.f32 %v805, %v830
      %v837 = vmul.f32 %v818, %v826
      %v838 = vmul.f32 %v806, %v830
      %v839 = vmul.f32 %v819, %v826
      %v840 = vmul.f32 %v807, %v830
      %v841 = vpack.c.bf16 %v835, %v833
      %v842 = vpack.c.bf16 %v836, %v834
      %v843 = vpack.c.bf16 %v839, %v837
      %v844 = vpack.c.bf16 %v840, %v838
      %845 = vrot.lane.b32.xlu0 %v645, 1
      %v846 = vpop.permute.xlu0 %845
      %847 = vrot.lane.b32.xlu0 %v647, 1
      %v848 = vpop.permute.xlu0 %847
      %849 = vrot.lane.b32.xlu0 %v649, 1
      %v850 = vpop.permute.xlu0 %849
      %851 = vrot.lane.b32.xlu0 %v651, 1
      %v852 = vpop.permute.xlu0 %851
      %857 = vrot.lane.b32.xlu0 %v644, 1
      %v858 = vpop.permute.xlu0 %857
      %859 = vrot.lane.b32.xlu0 %v646, 1
      %v860 = vpop.permute.xlu0 %859
      %861 = vrot.lane.b32.xlu0 %v648, 1
      %v862 = vpop.permute.xlu0 %861
      %863 = vrot.lane.b32.xlu0 %v650, 1
      %v864 = vpop.permute.xlu0 %863
      %vm865 = vcmask 7168
      %v866 = vsel %vm865, %v858, %v846
      %v867 = vsel %vm865, %v860, %v848
      %v868 = vsel %vm865, %v862, %v850
      %v869 = vsel %vm865, %v864, %v852
      %v878 = vsel %vm865, %v846, %v858
      %v879 = vsel %vm865, %v848, %v860
      %v880 = vsel %vm865, %v850, %v862
      %v881 = vsel %vm865, %v852, %v864
      %s882 = scalar_lea.vmem %s5, 3
      %v883 = vld [vmem:[%s882] ss:$8 sm:$0x3]
      %v885 = vlaneseq
      %v886 = vshrl.u32 %v885, 7
      %v887 = vsub.s32 0, %v886
      %v888 = vrot.slane %v883, %v887
      %v889 = vlaneseq
      %v890 = vshrl.u32 %v889, 7
      %v891 = vsub.s32 1, %v890
      %v892 = vrot.slane %v883, %v891
      %v895 = vmul.f32 %v878, %v888
      %v896 = vmul.f32 %v866, %v892
      %v897 = vmul.f32 %v879, %v888
      %v898 = vmul.f32 %v867, %v892
      %v899 = vmul.f32 %v880, %v888
      %v900 = vmul.f32 %v868, %v892
      %v901 = vmul.f32 %v881, %v888
      %v902 = vmul.f32 %v869, %v892
      %v903 = vpack.c.bf16 %v897, %v895
      %v904 = vpack.c.bf16 %v898, %v896
      %v905 = vpack.c.bf16 %v901, %v899
      %v906 = vpack.c.bf16 %v902, %v900
      %v907 = vpack.c.bf16 %v646, %v644
      %v908 = vpack.c.bf16 %v647, %v645
      %v909 = vpack.c.bf16 %v650, %v648
      %v910 = vpack.c.bf16 %v651, %v649
      %911 = vrot.lane.b32.xlu0 %v644, 127
      %v912 = vpop.permute.xlu0 %911
      %913 = vrot.lane.b32.xlu0 %v645, 127
      %v914 = vpop.permute.xlu0 %913
      %915 = vrot.lane.b32.xlu0 %v646, 127
      %v916 = vpop.permute.xlu0 %915
      %917 = vrot.lane.b32.xlu0 %v647, 127
      %v918 = vpop.permute.xlu0 %917
      %919 = vrot.lane.b32.xlu0 %v648, 127
      %v920 = vpop.permute.xlu0 %919
      %921 = vrot.lane.b32.xlu0 %v649, 127
      %v922 = vpop.permute.xlu0 %921
      %923 = vrot.lane.b32.xlu0 %v650, 127
      %v924 = vpop.permute.xlu0 %923
      %925 = vrot.lane.b32.xlu0 %v651, 127
      %v926 = vpop.permute.xlu0 %925
      %vm927 = vcmask 1039360
      %v928 = vsel %vm927, %v912, %v914
      %v929 = vsel %vm927, %v916, %v918
      %v930 = vsel %vm927, %v920, %v922
      %v931 = vsel %vm927, %v924, %v926
      %v944 = vsel %vm927, %v914, %v912
      %v945 = vsel %vm927, %v918, %v916
      %v946 = vsel %vm927, %v922, %v920
      %v947 = vsel %vm927, %v926, %v924
      %s948 = scalar_lea.vmem %s5, 5
      %v949 = vld [vmem:[%s948] ss:$8 sm:$0x3]
      %v951 = vlaneseq
      %v952 = vshrl.u32 %v951, 7
      %v953 = vsub.s32 0, %v952
      %v954 = vrot.slane %v949, %v953
      %v955 = vlaneseq
      %v956 = vshrl.u32 %v955, 7
      %v957 = vsub.s32 1, %v956
      %v958 = vrot.slane %v949, %v957
      %v961 = vmul.f32 %v928, %v954
      %v962 = vmul.f32 %v944, %v958
      %v963 = vmul.f32 %v929, %v954
      %v964 = vmul.f32 %v945, %v958
      %v965 = vmul.f32 %v930, %v954
      %v966 = vmul.f32 %v946, %v958
      %v967 = vmul.f32 %v931, %v954
      %v968 = vmul.f32 %v947, %v958
      %v969 = vpack.c.bf16 %v963, %v961
      %v970 = vpack.c.bf16 %v964, %v962
      %v971 = vpack.c.bf16 %v967, %v965
      %v972 = vpack.c.bf16 %v968, %v966
      %973 = vrot.lane.b32.xlu0 %v644, 113
      %v974 = vpop.permute.xlu0 %973
      %975 = vrot.lane.b32.xlu0 %v645, 113
      %v976 = vpop.permute.xlu0 %975
      %977 = vrot.lane.b32.xlu0 %v646, 113
      %v978 = vpop.permute.xlu0 %977
      %979 = vrot.lane.b32.xlu0 %v647, 113
      %v980 = vpop.permute.xlu0 %979
      %981 = vrot.lane.b32.xlu0 %v648, 113
      %v982 = vpop.permute.xlu0 %981
      %983 = vrot.lane.b32.xlu0 %v649, 113
      %v984 = vpop.permute.xlu0 %983
      %985 = vrot.lane.b32.xlu0 %v650, 113
      %v986 = vpop.permute.xlu0 %985
      %987 = vrot.lane.b32.xlu0 %v651, 113
      %v988 = vpop.permute.xlu0 %987
      %vm989 = vcmask 924672
      %v990 = vsel %vm989, %v974, %v976
      %v991 = vsel %vm989, %v978, %v980
      %v992 = vsel %vm989, %v982, %v984
      %v993 = vsel %vm989, %v986, %v988
      %v1006 = vsel %vm989, %v976, %v974
      %v1007 = vsel %vm989, %v980, %v978
      %v1008 = vsel %vm989, %v984, %v982
      %v1009 = vsel %vm989, %v988, %v986
      %s1010 = scalar_lea.vmem %s5, 6
      %v1011 = vld [vmem:[%s1010] ss:$8 sm:$0x3]
      %v1013 = vlaneseq
      %v1014 = vshrl.u32 %v1013, 7
      %v1015 = vsub.s32 0, %v1014
      %v1016 = vrot.slane %v1011, %v1015
      %v1017 = vlaneseq
      %v1018 = vshrl.u32 %v1017, 7
      %v1019 = vsub.s32 1, %v1018
      %v1020 = vrot.slane %v1011, %v1019
      %v1023 = vmul.f32 %v990, %v1016
      %v1024 = vmul.f32 %v1006, %v1020
      %v1025 = vmul.f32 %v991, %v1016
      %v1026 = vmul.f32 %v1007, %v1020
      %v1027 = vmul.f32 %v992, %v1016
      %v1028 = vmul.f32 %v1008, %v1020
      %v1029 = vmul.f32 %v993, %v1016
      %v1030 = vmul.f32 %v1009, %v1020
      %v1031 = vpack.c.bf16 %v1025, %v1023
      %v1032 = vpack.c.bf16 %v1026, %v1024
      %v1033 = vpack.c.bf16 %v1029, %v1027
      %v1034 = vpack.c.bf16 %v1030, %v1028
      %1035 = vrot.lane.b32.xlu0 %v644, 112
      %v1036 = vpop.permute.xlu0 %1035
      %1037 = vrot.lane.b32.xlu0 %v645, 112
      %v1038 = vpop.permute.xlu0 %1037
      %1039 = vrot.lane.b32.xlu0 %v646, 112
      %v1040 = vpop.permute.xlu0 %1039
      %1041 = vrot.lane.b32.xlu0 %v647, 112
      %v1042 = vpop.permute.xlu0 %1041
      %1043 = vrot.lane.b32.xlu0 %v648, 112
      %v1044 = vpop.permute.xlu0 %1043
      %1045 = vrot.lane.b32.xlu0 %v649, 112
      %v1046 = vpop.permute.xlu0 %1045
      %1047 = vrot.lane.b32.xlu0 %v650, 112
      %v1048 = vpop.permute.xlu0 %1047
      %1049 = vrot.lane.b32.xlu0 %v651, 112
      %v1050 = vpop.permute.xlu0 %1049
      %vm1051 = vcmask 916480
      %v1052 = vsel %vm1051, %v1036, %v1038
      %v1053 = vsel %vm1051, %v1040, %v1042
      %v1054 = vsel %vm1051, %v1044, %v1046
      %v1055 = vsel %vm1051, %v1048, %v1050
      %v1068 = vsel %vm1051, %v1038, %v1036
      %v1069 = vsel %vm1051, %v1042, %v1040
      %v1070 = vsel %vm1051, %v1046, %v1044
      %v1071 = vsel %vm1051, %v1050, %v1048
      %s1072 = scalar_lea.vmem %s5, 7
      %v1073 = vld [vmem:[%s1072] ss:$8 sm:$0x3]
      %v1075 = vlaneseq
      %v1076 = vshrl.u32 %v1075, 7
      %v1077 = vsub.s32 0, %v1076
      %v1078 = vrot.slane %v1073, %v1077
      %v1079 = vlaneseq
      %v1080 = vshrl.u32 %v1079, 7
      %v1081 = vsub.s32 1, %v1080
      %v1082 = vrot.slane %v1073, %v1081
      %v1085 = vmul.f32 %v1052, %v1078
      %v1086 = vmul.f32 %v1068, %v1082
      %v1087 = vmul.f32 %v1053, %v1078
      %v1088 = vmul.f32 %v1069, %v1082
      %v1089 = vmul.f32 %v1054, %v1078
      %v1090 = vmul.f32 %v1070, %v1082
      %v1091 = vmul.f32 %v1055, %v1078
      %v1092 = vmul.f32 %v1071, %v1082
      %v1093 = vpack.c.bf16 %v1087, %v1085
      %v1094 = vpack.c.bf16 %v1088, %v1086
      %v1095 = vpack.c.bf16 %v1091, %v1089
      %v1096 = vpack.c.bf16 %v1092, %v1090
      %1097 = vrot.lane.b32.xlu0 %v644, 111
      %v1098 = vpop.permute.xlu0 %1097
      %1099 = vrot.lane.b32.xlu0 %v645, 111
      %v1100 = vpop.permute.xlu0 %1099
      %1101 = vrot.lane.b32.xlu0 %v646, 111
      %v1102 = vpop.permute.xlu0 %1101
      %1103 = vrot.lane.b32.xlu0 %v647, 111
      %v1104 = vpop.permute.xlu0 %1103
      %1105 = vrot.lane.b32.xlu0 %v648, 111
      %v1106 = vpop.permute.xlu0 %1105
      %1107 = vrot.lane.b32.xlu0 %v649, 111
      %v1108 = vpop.permute.xlu0 %1107
      %1109 = vrot.lane.b32.xlu0 %v650, 111
      %v1110 = vpop.permute.xlu0 %1109
      %1111 = vrot.lane.b32.xlu0 %v651, 111
      %v1112 = vpop.permute.xlu0 %1111
      %vm1113 = vcmask 908288
      %v1114 = vsel %vm1113, %v1098, %v1100
      %v1115 = vsel %vm1113, %v1102, %v1104
      %v1116 = vsel %vm1113, %v1106, %v1108
      %v1117 = vsel %vm1113, %v1110, %v1112
      %v1130 = vsel %vm1113, %v1100, %v1098
      %v1131 = vsel %vm1113, %v1104, %v1102
      %v1132 = vsel %vm1113, %v1108, %v1106
      %v1133 = vsel %vm1113, %v1112, %v1110
      %s1134 = scalar_lea.vmem %s5, 16
      %v1135 = vld [vmem:[%s1134] ss:$8 sm:$0x3]
      %v1137 = vlaneseq
      %v1138 = vshrl.u32 %v1137, 7
      %v1139 = vsub.s32 0, %v1138
      %v1140 = vrot.slane %v1135, %v1139
      %v1141 = vlaneseq
      %v1142 = vshrl.u32 %v1141, 7
      %v1143 = vsub.s32 1, %v1142
      %v1144 = vrot.slane %v1135, %v1143
      %v1147 = vmul.f32 %v1114, %v1140
      %v1148 = vmul.f32 %v1130, %v1144
      %v1149 = vmul.f32 %v1115, %v1140
      %v1150 = vmul.f32 %v1131, %v1144
      %v1151 = vmul.f32 %v1116, %v1140
      %v1152 = vmul.f32 %v1132, %v1144
      %v1153 = vmul.f32 %v1117, %v1140
      %v1154 = vmul.f32 %v1133, %v1144
      %v1155 = vpack.c.bf16 %v1149, %v1147
      %v1156 = vpack.c.bf16 %v1150, %v1148
      %v1157 = vpack.c.bf16 %v1153, %v1151
      %v1158 = vpack.c.bf16 %v1154, %v1152
      %v1159 = vld [vmem:[%s3] sm:$0x7]
      %v1160 = vld [vmem:[#allocation2] sm:$0x1]
      %1162 = vset.pattern.permute.xlu0 0
      %1163 = vperm.xlu0 %1162, %v1160
      %v1164 = vpop.permute.xlu0 %1163
      %v1166 = vlaneseq
      %v1167 = vshrl.u32 %v1166, 7
      %v1168 = vsub.s32 0, %v1167
      %v1169 = vrot.slane %v1164, %v1168
      %v1172 = vunpack.c.l.s4 1966171168
      %v1173 = vunpack.c.0.s8 %v1172
      %v1174 = vlaneseq
      %v1175 = vshrl.u32 %v1174, 7
      %v1176 = vsub.s32 %v1173, %v1175
      %v1177 = vrot.slane %v1159, %v1176
      %v1178 = vcombine.high %v1177, %v1177
      %v1180 = vunpack.c.l.s4 1966171168
      %v1181 = vunpack.c.0.s8 %v1180
      %v1182 = vlaneseq
      %v1183 = vshrl.u32 %v1182, 7
      %v1184 = vsub.s32 %v1181, %v1183
      %v1185 = vrot.slane %v1177, %v1184
      %v1187 = vunpack.c.l.s4 1966171168
      %v1188 = vunpack.c.0.s8 %v1187
      %v1189 = vlaneseq
      %v1190 = vshrl.u32 %v1189, 7
      %v1191 = vsub.s32 %v1188, %v1190
      %v1192 = vrot.slane %v1178, %v1191
      %v1193 = vcombine.high %v1185, %v1185
      %v1197 = vsel %vm531, %v1193, 0
      %1199 = vmatprep.subr.bf16.mxu0 %v906
      %1200 = vmatpush1.bf16.msra.mxu0 %v905
      %1201 = vmatprep.subr.bf16.mxu0 %v904
      %1202 = vmatpush1.bf16.msra.mxu0 %v903
      %1203 = vmatprep.subr.bf16.mxu0 %v844
      %1204 = vmatpush1.bf16.msra.mxu0 %v843
      %1205 = vmatprep.subr.bf16.mxu0 %v842
      %1206 = vmatpush1.bf16.msra.mxu0 %v841
      %1207 = vmatprep.subr.bf16.mxu0 %v782
      %1208 = vmatpush1.bf16.msra.mxu0 %v781
      %1209 = vmatprep.subr.bf16.mxu0 %v780
      %1210 = vmatpush1.bf16.msra.mxu0 %v779
      %1211 = vmatprep.subr.bf16.mxu0 %v720
      %1212 = vmatpush1.bf16.msra.mxu0 %v719
      %1213 = vmatprep.subr.bf16.mxu0 %v718
      %1214 = vmatpush1.bf16.msra.mxu0 %v717
      %1215 = vmatprep.subr.bf16.mxu0 %v1096
      %1216 = vmatpush2.bf16.msra.mxu0 %v1095
      %1217 = vmatprep.subr.bf16.mxu0 %v1094
      %1218 = vmatpush2.bf16.msra.mxu0 %v1093
      %1219 = vmatprep.subr.bf16.mxu0 %v1034
      %1220 = vmatpush2.bf16.msra.mxu0 %v1033
      %1221 = vmatprep.subr.bf16.mxu0 %v1032
      %1222 = vmatpush2.bf16.msra.mxu0 %v1031
      %1223 = vmatprep.subr.bf16.mxu0 %v972
      %1224 = vmatpush2.bf16.msra.mxu0 %v971
      %1225 = vmatprep.subr.bf16.mxu0 %v970
      %1226 = vmatpush2.bf16.msra.mxu0 %v969
      %1227 = vmatprep.subr.bf16.mxu0 %v910
      %1228 = vmatpush2.bf16.msra.mxu0 %v909
      %1229 = vmatprep.subr.bf16.mxu0 %v908
      %1230 = vmatpush2.bf16.msra.mxu0 %v907
      %1231 = vmatprep.mubr.bf16.mxu0 %v1192
      %1232 = vmatmul.mubr.bf16.gmra.mxu0 %v1185
      %v1233 = vpop.f32.mrf.mxu0
      %v1234 = vadd.f32 %v1169, %v1233
      %v1235 = vpop.f32.mrf.mxu0
      %v1236 = vadd.f32 %v1169, %v1235
      %v1237 = vpop.f32.mrf.mxu0
      %v1238 = vpop.f32.mrf.mxu0
      %1239 = vdwg.mxu0
      %1240 = vmatprep.subr.bf16.mxu0 0
      %1241 = vmatpush1.bf16.msra.mxu0 0
      %1242 = vmatprep.subr.bf16.mxu0 0
      %1243 = vmatpush1.bf16.msra.mxu0 0
      %1244 = vmatprep.subr.bf16.mxu0 0
      %1245 = vmatpush1.bf16.msra.mxu0 0
      %1246 = vmatprep.subr.bf16.mxu0 0
      %1247 = vmatpush1.bf16.msra.mxu0 0
      %1248 = vmatprep.subr.bf16.mxu0 0
      %1249 = vmatpush1.bf16.msra.mxu0 0
      %1250 = vmatprep.subr.bf16.mxu0 0
      %1251 = vmatpush1.bf16.msra.mxu0 0
      %1252 = vmatprep.subr.bf16.mxu0 %v1158
      %1253 = vmatpush1.bf16.msra.mxu0 %v1157
      %1254 = vmatprep.subr.bf16.mxu0 %v1156
      %1255 = vmatpush1.bf16.msra.mxu0 %v1155
      %1256 = vmatprep.subr.bf16.mxu0 0
      %1257 = vmatpush2.bf16.msra.mxu0 0
      %1258 = vmatprep.subr.bf16.mxu0 0
      %1259 = vmatpush2.bf16.msra.mxu0 0
      %1260 = vmatprep.subr.bf16.mxu0 0
      %1261 = vmatpush2.bf16.msra.mxu0 0
      %1262 = vmatprep.subr.bf16.mxu0 0
      %1263 = vmatpush2.bf16.msra.mxu0 0
      %1264 = vmatprep.subr.bf16.mxu0 0
      %1265 = vmatpush2.bf16.msra.mxu0 0
      %1266 = vmatprep.subr.bf16.mxu0 0
      %1267 = vmatpush2.bf16.msra.mxu0 0
      %1268 = vmatprep.subr.bf16.mxu0 0
      %1269 = vmatpush2.bf16.msra.mxu0 0
      %1270 = vmatprep.subr.bf16.mxu0 0
      %1271 = vmatpush2.bf16.msra.mxu0 0
      %1272 = vmatprep.mubr.bf16.mxu0 0
      %1273 = vmatmul.mubr.bf16.gmra.mxu0 %v1197
      %v1274 = vpop.f32.mrf.mxu0
      %v1275 = vadd.f32 %v1234, %v1274
      %v1276 = vpop.f32.mrf.mxu0
      %v1277 = vadd.f32 %v1236, %v1276
      %v1278 = vpop.f32.mrf.mxu0
      %v1279 = vpop.f32.mrf.mxu0
      %1280 = vdwg.mxu0
      %v1283 = vcombine.low %v1275, %v1277
      %v1285 = vunpack.c.l.s4 1966171168
      %v1286 = vunpack.c.0.s8 %v1285
      %v1287 = vlaneseq
      %v1288 = vshrl.u32 %v1287, 7
      %v1289 = vsub.s32 %v1286, %v1288
      %v1290 = vrot.slane %v1283, %v1289
      %v1292 = vunpack.c.l.s4 1966171168
      %v1293 = vunpack.c.0.s8 %v1292
      %v1294 = vlaneseq
      %v1295 = vshrl.u32 %v1294, 7
      %v1296 = vsub.s32 %v1293, %v1295
      %v1297 = vrot.slane %v1290, %v1296
      %v1299 = vlaneseq
      %vm1300 = vcmp.ge.s32.totalorder %v1299, 0
      %vm1301 = vcmp.lt.s32.totalorder %v1299, 256
      %vm1302 = vmand %vm1300, %vm1301
      %1303 = vst.msk [vmem:[%s251] sm:$0x3] %vm1302, %v1297
      %p1304 = scmp.lt.s32.totalorder %s19, 1
      %s1305 = scalar_select %p1304, %s19, 1
      %s1306 = smul.addr %s1305, 2
      %s1307 = scalar_lea.vmem %s6, %s1306
      // Predicated region
      $region45: #{decoder_forward.1} parent=43 // pred_check
        %p1308 = pneg %p168
      $region46: #{decoder_forward.1} parent=43 // pred_check_branch
        %1310 = sbr.rel (%p1308) target = $region48
      $region47: #{decoder_forward.1} parent=43 // pred_region
        _
      $region48: #{decoder_forward.1} parent=43 // pred_fallthru
        _
    $region44: #{decoder_forward.1} parent=5 // pred_fallthru
      _
    %p1311 = scmp.le.s32.totalorder 2, %s14
    // Predicated region
    $region49: #{decoder_forward.1} parent=5 // pred_check
      %p1312 = pneg %p1311
    $region50: #{decoder_forward.1} parent=5 // pred_check_branch
      %1314 = sbr.rel (%p1312) target = $region52
    $region51: #{decoder_forward.1} parent=5 // pred_region
      %s1315 = ssub.s32 %s14, 2
      // Predicated region
      $region53: #{decoder_forward.1} parent=51 // pred_check
        %p1316 = pneg %p174
      $region54: #{decoder_forward.1} parent=51 // pred_check_branch
        %1318 = sbr.rel (%p1316) target = $region56
      $region55: #{decoder_forward.1} parent=51 // pred_region
        %p1319 = scmp.lt.s32.totalorder %s20, 1
        %s1320 = scalar_select %p1319, %s20, 1
        %s1321 = smul.addr %s1320, 2
        %s1322 = scalar_lea.vmem %s6, %s1321
      $region56: #{decoder_forward.1} parent=51 // pred_fallthru
        _
    $region52: #{decoder_forward.1} parent=5 // pred_fallthru
      _
  $region6: #{decoder_forward.1} parent=0 // loop_footer
    %s18 = sadd.s32 1, %s14
  $region7: #{decoder_forward.1} parent=0 // loop_footer_branch
    %13 = sbr.rel target = $region3
  $region8: #{decoder_forward.1} parent=0 // loop_exit
    _

</llo_original>
